<compile_context>
chip_gen: v7x
topology: tpu7x:2x2x1
jax: 0.10.0
libtpu: 0.0.40
codegen_flags: <defaults>
</compile_context>

<pallas_src>
import functools

import jax
import jax.numpy as jnp
from jax.experimental import pallas as pl
from jax.experimental.pallas import tpu as pltpu


# ---- shapes implied by the PyTorch module ---------------------------------
IN_DIM = 2          # nn.Linear(2, h)
H = 4               # inner Linear has in_features=4  ->  h must be 4
OUT_DIM = 2 * H     # nn.Linear(4, 2h, bias=False)    ->  8

# ---- lane-dense slab constants ---------------------------------------------
_GROUP = 64                     # input rows packed per slab row
_SLAB_IN = _GROUP * IN_DIM      # 128 lanes  (x slab last dim)
_SLAB_OUT = _GROUP * OUT_DIM    # 512 lanes  (y slab last dim)


def _fused_affine_kernel(x_ref, w_ref, b_ref, o_ref, *, compute_dtype):
    """One MXU matmul on lane-dense slabs + bias add.

    x_ref: (rows_blk, 128)   -- 64 input rows (2 feats each) per slab row
    w_ref: (128, 512)        -- kron(I_64, Wf), grid-invariant
    b_ref: (1, 512)          -- tiled fused bias, grid-invariant
    o_ref: (rows_blk, 512)   -- 64 output rows (8 feats each) per slab row
    """
    x = x_ref[...].astype(compute_dtype)   # no-op when compute_dtype == f32
    w = w_ref[...].astype(compute_dtype)
    y = jnp.dot(x, w, preferred_element_type=jnp.float32) + b_ref[...]
    o_ref[...] = y.astype(o_ref.dtype)


def my_model_forward(
    x,
    w1,
    b1,
    w2,
    *,
    block_rows: int = 131072,          # input rows per grid step (sweepable)
    min_rows_for_pallas: int | None = None,  # default: == block_rows
    matmul_in_bf16: bool = False,      # v5e: cast MXU operands to bf16
    out_dtype=jnp.float32,             # bf16 halves the dominant HBM stream
):
    """x: (N, 2) f32.
    w1: (h, 2)   torch Linear(2, h).weight
    b1: (h,)     torch Linear(2, h).bias
    w2: (2h, 4)  torch Linear(4, 2h, bias=False).weight   (requires h == 4)
    Returns (N, 2h) == inner.l(self.l(x))."""
    N, in_dim = x.shape
    h = w1.shape[0]
    assert in_dim == IN_DIM, "MyModel.l expects 2 input features"
    assert h == H, "Submodule.l has in_features=4, so h must be 4"
    assert w2.shape == (2 * h, 4), "inner Linear weight must be (2h, 4)"
    assert block_rows % _GROUP == 0, "block_rows must be a multiple of 64"
    if min_rows_for_pallas is None:
        min_rows_for_pallas = block_rows

    # --- algebraic fusion of the two linear layers ---------------------------
    w1t = jnp.transpose(w1).astype(jnp.float32)        # (2, h)
    w2t = jnp.transpose(w2).astype(jnp.float32)        # (h, 2h)
    wf = w1t @ w2t                                     # (2, 8)
    bf = b1.astype(jnp.float32) @ w2t                  # (8,)

    if N < min_rows_for_pallas:
        # Small batch: the whole op is a few microseconds of HBM traffic;
        # a pallas_call (+ pad/slice) is pure overhead.  Let XLA fuse it.
        return (x.astype(jnp.float32) @ wf + bf).astype(out_dtype)

    # --- lane-dense expansion -------------------------------------------------
    # Block-diagonal weight: y_slab = x_slab @ kron(I_64, Wf) + tile(bf, 64)
    w_slab = jnp.kron(jnp.eye(_GROUP, dtype=jnp.float32), wf)     # (128, 512)
    b_slab = jnp.tile(bf, _GROUP).reshape(1, _SLAB_OUT)           # (1, 512)

    # Pad only to the 64-row slab quantum (needed for the zero-copy reshape);
    # the grid itself is ragged and Pallas masks the boundary block.
    n_pad = pl.cdiv(N, _GROUP) * _GROUP
    if n_pad != N:
        x = jnp.pad(x, ((0, n_pad - N), (0, 0)))
    slab_rows = n_pad // _GROUP
    x_slab = x.astype(jnp.float32).reshape(slab_rows, _SLAB_IN)   # (slab_rows, 128)

    # Slab rows per grid step: 2048 by default (x 1 MiB + y 4 MiB per buffer,
    # ~10.5 MiB double-buffered -> fits the 16 MiB scoped-VMEM default on v5e).
    rows_blk = block_rows // _GROUP
    rows_blk = min(rows_blk, ((slab_rows + 7) // 8) * 8)  # keep % 8 == 0
    grid = (pl.cdiv(slab_rows, rows_blk),)

    compute_dtype = jnp.bfloat16 if matmul_in_bf16 else jnp.float32
    kernel = functools.partial(_fused_affine_kernel, compute_dtype=compute_dtype)

    itemsize = 4  # f32 activations
    bytes_accessed = (
        x_slab.size * itemsize
        + slab_rows * _SLAB_OUT * jnp.dtype(out_dtype).itemsize
        + w_slab.size * itemsize
        + b_slab.size * itemsize
    )
    flops = 2 * slab_rows * _SLAB_IN * _SLAB_OUT  # true kron-matmul FLOPs

    y_slab = pl.pallas_call(
        kernel,
        out_shape=jax.ShapeDtypeStruct((slab_rows, _SLAB_OUT), out_dtype),
        grid=grid,
        in_specs=[
            # streamed activations: new block each grid step
            pl.BlockSpec((rows_blk, _SLAB_IN), lambda i: (i, 0)),
            # grid-invariant weight / bias: constant block index => no re-DMA
            pl.BlockSpec((_SLAB_IN, _SLAB_OUT), lambda i: (0, 0)),
            pl.BlockSpec((1, _SLAB_OUT), lambda i: (0, 0)),
        ],
        out_specs=pl.BlockSpec((rows_blk, _SLAB_OUT), lambda i: (i, 0)),
        compiler_params=pltpu.CompilerParams(
            dimension_semantics=("parallel",),   # megacore sharding on v7x
        ),
        cost_estimate=pl.CostEstimate(
            flops=flops, transcendentals=0, bytes_accessed=bytes_accessed),
    )(x_slab, w_slab, b_slab)

    y = y_slab.reshape(n_pad, OUT_DIM)
    if n_pad != N:
        y = y[:N]
    return y


def _init_params(h: int):
    """Deterministic parameter init mimicking torch Linear defaults
    (uniform in +/- 1/sqrt(fan_in))."""
    key = jax.random.PRNGKey(0)
    k1, k2, k3 = jax.random.split(key, 3)
    bound1 = 1.0 / jnp.sqrt(2.0)   # fan_in = 2
    bound2 = 1.0 / jnp.sqrt(4.0)   # fan_in = 4
    w1 = jax.random.uniform(k1, (h, 2), jnp.float32, -bound1, bound1)
    b1 = jax.random.uniform(k2, (h,), jnp.float32, -bound1, bound1)
    w2 = jax.random.uniform(k3, (h * 2, 4), jnp.float32, -bound2, bound2)
    buf = jnp.array(0, dtype=jnp.int32)  # registered buffer; unused in forward
    return w1, b1, w2, buf


if __name__ == "__main__":
    h = 4           # required so Linear(2, h) output feeds Linear(4, 2h)
    N = 1000        # small batch; not a multiple of 64 -> exercises slab padding

    w1, b1, w2, buf = _init_params(h)

    x = jax.random.normal(
        jax.random.fold_in(jax.random.PRNGKey(0), 1), (N, 2), jnp.float32)

    # Force the Pallas path for the demo (production default keeps small
    # batches on the fused-XLA fallback).
    fwd = jax.jit(functools.partial(my_model_forward, min_rows_for_pallas=0))
    out = jax.block_until_ready(fwd(x, w1, b1, w2))

    # pure-JAX two-layer reference (un-fused) for sanity
    ref = (x @ w1.T + b1) @ w2.T
    assert out.shape == (N, 2 * h)
    assert jnp.allclose(out, ref, atol=1e-4, rtol=1e-4)

    # tiny-batch fallback path (plain XLA) also checked
    fwd_small = jax.jit(my_model_forward)
    out_small = jax.block_until_ready(fwd_small(x[:64], w1, b1, w2))
    assert jnp.allclose(out_small, ref[:64], atol=1e-4, rtol=1e-4)

    print("KERNEL_OK")
</pallas_src>

<mosaic_0001>
module attributes {stable_mosaic.version = 11 : i64} {
  func.func @_fused_affine_kernel(%arg0: i32, %arg1: memref<16x128xf32, #tpu.memory_space<vmem>>, %arg2: memref<128x512xf32, #tpu.memory_space<vmem>>, %arg3: memref<1x512xf32, #tpu.memory_space<vmem>>, %arg4: memref<16x512xf32, #tpu.memory_space<vmem>>) attributes {dimension_semantics = [#tpu.dimension_semantics<parallel>], iteration_bounds = array<i64: 1>, scalar_prefetch = 0 : i64, scratch_operands = 0 : i64, tpu.core_type = #tpu.core_type<tc>, window_params = [{transform_indices = @transform_0, window_bounds = array<i64: 16, 128>}, {pipeline_mode = #tpu.pipeline_mode<synchronous>, transform_indices = @transform_1, window_bounds = array<i64: 128, 512>}, {pipeline_mode = #tpu.pipeline_mode<synchronous>, transform_indices = @transform_2, window_bounds = array<i64: 1, 512>}, {transform_indices = @transform_3, window_bounds = array<i64: 16, 512>}]} {
    %c0 = arith.constant 0 : index
    %c0_0 = arith.constant 0 : index
    %0 = vector.load %arg1[%c0, %c0_0] : memref<16x128xf32, #tpu.memory_space<vmem>>, vector<16x128xf32>
    %c0_1 = arith.constant 0 : index
    %c0_2 = arith.constant 0 : index
    %1 = vector.load %arg2[%c0_1, %c0_2] : memref<128x512xf32, #tpu.memory_space<vmem>>, vector<128x512xf32>
    %cst = arith.constant dense<0.000000e+00> : vector<16x512xf32>
    %2 = tpu.matmul %0, %1, %cst {dimension_numbers = #tpu.dot_dimension_numbers<[1], [0], [0], [1], [0, 0, 1, 1], [], []>} : vector<16x128xf32>, vector<128x512xf32>, vector<16x512xf32> -> vector<16x512xf32>
    %c0_3 = arith.constant 0 : index
    %c0_4 = arith.constant 0 : index
    %3 = vector.load %arg3[%c0_3, %c0_4] : memref<1x512xf32, #tpu.memory_space<vmem>>, vector<1x512xf32>
    %4 = vector.broadcast %3 : vector<1x512xf32> to vector<16x512xf32>
    %5 = arith.addf %2, %4 : vector<16x512xf32>
    %c0_5 = arith.constant 0 : index
    %c0_6 = arith.constant 0 : index
    %6 = vector.load %arg4[%c0_5, %c0_6] : memref<16x512xf32, #tpu.memory_space<vmem>>, vector<16x512xf32>
    tpu.vector_store %arg4[%c0_5, %c0_6], %5 {strides = array<i32>} : memref<16x512xf32, #tpu.memory_space<vmem>>, vector<16x512xf32>,
    return
  }
  func.func @transform_0(%arg0: i32) -> (i32, i32) {
    %c0_i32 = arith.constant 0 : i32
    %c0_i32_0 = arith.constant 0 : i32
    return %arg0, %c0_i32 : i32, i32
  }
  func.func @transform_1(%arg0: i32) -> (i32, i32) {
    %c0_i32 = arith.constant 0 : i32
    %c0_i32_0 = arith.constant 0 : i32
    %c0_i32_1 = arith.constant 0 : i32
    return %c0_i32, %c0_i32_0 : i32, i32
  }
  func.func @transform_2(%arg0: i32) -> (i32, i32) {
    %c0_i32 = arith.constant 0 : i32
    %c0_i32_0 = arith.constant 0 : i32
    %c0_i32_1 = arith.constant 0 : i32
    return %c0_i32, %c0_i32_0 : i32, i32
  }
  func.func @transform_3(%arg0: i32) -> (i32, i32) {
    %c0_i32 = arith.constant 0 : i32
    %c0_i32_0 = arith.constant 0 : i32
    return %arg0, %c0_i32 : i32, i32
  }
}

</mosaic_0001>

<llo_original>
// kernel: tile.8
$region0: #{tile.8}
  #allocation0 [shape = 's32[1]{0}', space=sflag, size = 0x4, scoped, tag = 'scoped memory for tile.8']
  %s0 = inlined_call_operand.vmem [shape: f32[8], index: 0, kind: input, shape index: {}]
  %s1 = inlined_call_operand.vmem [shape: f32[64,8], index: 1, kind: output, shape index: {}]
  // Predicated region
  $region2: #{tile.8} parent=0 // pred_check
    _
  $region3: #{tile.8} parent=0 // pred_check_branch
    %3 = sbr.rel (0) target = $region5
  $region4: #{tile.8} parent=0 // pred_region
    _
  $region5: #{tile.8} parent=0 // pred_fallthru
    _
  %v4 = vld [vmem:[%s0] ss:$0 sm:$0xff]
  %5 = vst [vmem:[%s1] sm:$0xff] %v4
  %s6 = scalar_lea.vmem %s1, 8
  %7 = vst [vmem:[%s6] sm:$0xff] %v4
  %s8 = scalar_lea.vmem %s1, 16
  %9 = vst [vmem:[%s8] sm:$0xff] %v4
  %s10 = scalar_lea.vmem %s1, 24
  %11 = vst [vmem:[%s10] sm:$0xff] %v4
  %s12 = scalar_lea.vmem %s1, 32
  %13 = vst [vmem:[%s12] sm:$0xff] %v4
  %s14 = scalar_lea.vmem %s1, 40
  %15 = vst [vmem:[%s14] sm:$0xff] %v4
  %s16 = scalar_lea.vmem %s1, 48
  %17 = vst [vmem:[%s16] sm:$0xff] %v4
  %s18 = scalar_lea.vmem %s1, 56
  %19 = vst [vmem:[%s18] sm:$0xff] %v4

// kernel: tile.9
$region0: #{tile.9}
  %s0 = inlined_call_operand.vmem [shape: f32[64,8], index: 0, kind: input, shape index: {}]
  %s1 = inlined_call_operand.vmem [shape: f32[1,512], index: 1, kind: output, shape index: {}]
  $region1: #{tile.9} parent=0
    #allocation0 [shape = 'u8[16384]{0}', space=vmem, size = 0x4000, scoped, tag = 'scoped mem for output reshape']
    %s2 = smov 3
    %v3 = vld [vmem:[%s0] ss:$16 sm:%s2]
    %s4 = smov 12
    %v5 = vld [vmem:[%s0] ss:$16 sm:%s4]
    %vm6 = vcmask 1043458
    %v7 = vsel %vm6, %v5, %v3
    %vm8 = vcmask 64512
    %9 = vst.msk [vmem:[#allocation0] ss:$8 sm:$0xf] %vm8, %v7
    %s10 = scalar_lea.vmem %s0, 15
    %s11 = smov 3
    %v12 = vld [vmem:[%s10] ss:$16 sm:%s11]
    %s13 = scalar_lea.vmem %s0, 15
    %s14 = smov 12
    %v15 = vld [vmem:[%s13] ss:$16 sm:%s14]
    %vm16 = vcmask 1043458
    %v17 = vsel %vm16, %v15, %v12
    %18 = vrot.lane.b32.xlu0 %v17, 120
    %v19 = vpop.permute.xlu0 %18
    %vm20 = vcmask 1048512
    %21 = vst.msk [vmem:[#allocation0] ss:$8 sm:$0xf] %vm20, %v19
    %s22 = scalar_lea.vmem %s0, 14
    %s23 = smov 3
    %v24 = vld [vmem:[%s22] ss:$16 sm:%s23]
    %s25 = scalar_lea.vmem %s0, 14
    %s26 = smov 12
    %v27 = vld [vmem:[%s25] ss:$16 sm:%s26]
    %vm28 = vcmask 1043458
    %v29 = vsel %vm28, %v27, %v24
    %30 = vrot.lane.b32.xlu0 %v29, 112
    %v31 = vpop.permute.xlu0 %30
    %vm32 = vcmask 982912
    %33 = vst.msk [vmem:[#allocation0] ss:$8 sm:$0xf] %vm32, %v31
    %s34 = scalar_lea.vmem %s0, 13
    %s35 = smov 3
    %v36 = vld [vmem:[%s34] ss:$16 sm:%s35]
    %s37 = scalar_lea.vmem %s0, 13
    %s38 = smov 12
    %v39 = vld [vmem:[%s37] ss:$16 sm:%s38]
    %vm40 = vcmask 1043458
    %v41 = vsel %vm40, %v39, %v36
    %42 = vrot.lane.b32.xlu0 %v41, 104
    %v43 = vpop.permute.xlu0 %42
    %vm44 = vcmask 917312
    %45 = vst.msk [vmem:[#allocation0] ss:$8 sm:$0xf] %vm44, %v43
    %s46 = scalar_lea.vmem %s0, 12
    %s47 = smov 3
    %v48 = vld [vmem:[%s46] ss:$16 sm:%s47]
    %s49 = scalar_lea.vmem %s0, 12
    %s50 = smov 12
    %v51 = vld [vmem:[%s49] ss:$16 sm:%s50]
    %vm52 = vcmask 1043458
    %v53 = vsel %vm52, %v51, %v48
    %54 = vrot.lane.b32.xlu0 %v53, 96
    %v55 = vpop.permute.xlu0 %54
    %vm56 = vcmask 851712
    %57 = vst.msk [vmem:[#allocation0] ss:$8 sm:$0xf] %vm56, %v55
    %s58 = scalar_lea.vmem %s0, 11
    %s59 = smov 3
    %v60 = vld [vmem:[%s58] ss:$16 sm:%s59]
    %s61 = scalar_lea.vmem %s0, 11
    %s62 = smov 12
    %v63 = vld [vmem:[%s61] ss:$16 sm:%s62]
    %vm64 = vcmask 1043458
    %v65 = vsel %vm64, %v63, %v60
    %66 = vrot.lane.b32.xlu0 %v65, 88
    %v67 = vpop.permute.xlu0 %66
    %vm68 = vcmask 786112
    %69 = vst.msk [vmem:[#allocation0] ss:$8 sm:$0xf] %vm68, %v67
    %s70 = scalar_lea.vmem %s0, 10
    %s71 = smov 3
    %v72 = vld [vmem:[%s70] ss:$16 sm:%s71]
    %s73 = scalar_lea.vmem %s0, 10
    %s74 = smov 12
    %v75 = vld [vmem:[%s73] ss:$16 sm:%s74]
    %vm76 = vcmask 1043458
    %v77 = vsel %vm76, %v75, %v72
    %78 = vrot.lane.b32.xlu0 %v77, 80
    %v79 = vpop.permute.xlu0 %78
    %vm80 = vcmask 720512
    %81 = vst.msk [vmem:[#allocation0] ss:$8 sm:$0xf] %vm80, %v79
    %s82 = scalar_lea.vmem %s0, 9
    %s83 = smov 3
    %v84 = vld [vmem:[%s82] ss:$16 sm:%s83]
    %s85 = scalar_lea.vmem %s0, 9
    %s86 = smov 12
    %v87 = vld [vmem:[%s85] ss:$16 sm:%s86]
    %vm88 = vcmask 1043458
    %v89 = vsel %vm88, %v87, %v84
    %90 = vrot.lane.b32.xlu0 %v89, 72
    %v91 = vpop.permute.xlu0 %90
    %vm92 = vcmask 654912
    %93 = vst.msk [vmem:[#allocation0] ss:$8 sm:$0xf] %vm92, %v91
    %s94 = scalar_lea.vmem %s0, 8
    %s95 = smov 3
    %v96 = vld [vmem:[%s94] ss:$16 sm:%s95]
    %s97 = scalar_lea.vmem %s0, 8
    %s98 = smov 12
    %v99 = vld [vmem:[%s97] ss:$16 sm:%s98]
    %vm100 = vcmask 1043458
    %v101 = vsel %vm100, %v99, %v96
    %102 = vrot.lane.b32.xlu0 %v101, 64
    %v103 = vpop.permute.xlu0 %102
    %vm104 = vcmask 589312
    %105 = vst.msk [vmem:[#allocation0] ss:$8 sm:$0xf] %vm104, %v103
    %s106 = scalar_lea.vmem %s0, 7
    %s107 = smov 3
    %v108 = vld [vmem:[%s106] ss:$16 sm:%s107]
    %s109 = scalar_lea.vmem %s0, 7
    %s110 = smov 12
    %v111 = vld [vmem:[%s109] ss:$16 sm:%s110]
    %vm112 = vcmask 1043458
    %v113 = vsel %vm112, %v111, %v108
    %114 = vrot.lane.b32.xlu0 %v113, 56
    %v115 = vpop.permute.xlu0 %114
    %vm116 = vcmask 523712
    %117 = vst.msk [vmem:[#allocation0] ss:$8 sm:$0xf] %vm116, %v115
    %s118 = scalar_lea.vmem %s0, 6
    %s119 = smov 3
    %v120 = vld [vmem:[%s118] ss:$16 sm:%s119]
    %s121 = scalar_lea.vmem %s0, 6
    %s122 = smov 12
    %v123 = vld [vmem:[%s121] ss:$16 sm:%s122]
    %vm124 = vcmask 1043458
    %v125 = vsel %vm124, %v123, %v120
    %126 = vrot.lane.b32.xlu0 %v125, 48
    %v127 = vpop.permute.xlu0 %126
    %vm128 = vcmask 458112
    %129 = vst.msk [vmem:[#allocation0] ss:$8 sm:$0xf] %vm128, %v127
    %s130 = scalar_lea.vmem %s0, 5
    %s131 = smov 3
    %v132 = vld [vmem:[%s130] ss:$16 sm:%s131]
    %s133 = scalar_lea.vmem %s0, 5
    %s134 = smov 12
    %v135 = vld [vmem:[%s133] ss:$16 sm:%s134]
    %vm136 = vcmask 1043458
    %v137 = vsel %vm136, %v135, %v132
    %138 = vrot.lane.b32.xlu0 %v137, 40
    %v139 = vpop.permute.xlu0 %138
    %vm140 = vcmask 392512
    %141 = vst.msk [vmem:[#allocation0] ss:$8 sm:$0xf] %vm140, %v139
    %s142 = scalar_lea.vmem %s0, 4
    %s143 = smov 3
    %v144 = vld [vmem:[%s142] ss:$16 sm:%s143]
    %s145 = scalar_lea.vmem %s0, 4
    %s146 = smov 12
    %v147 = vld [vmem:[%s145] ss:$16 sm:%s146]
    %vm148 = vcmask 1043458
    %v149 = vsel %vm148, %v147, %v144
    %150 = vrot.lane.b32.xlu0 %v149, 32
    %v151 = vpop.permute.xlu0 %150
    %vm152 = vcmask 326912
    %153 = vst.msk [vmem:[#allocation0] ss:$8 sm:$0xf] %vm152, %v151
    %s154 = scalar_lea.vmem %s0, 3
    %s155 = smov 3
    %v156 = vld [vmem:[%s154] ss:$16 sm:%s155]
    %s157 = scalar_lea.vmem %s0, 3
    %s158 = smov 12
    %v159 = vld [vmem:[%s157] ss:$16 sm:%s158]
    %vm160 = vcmask 1043458
    %v161 = vsel %vm160, %v159, %v156
    %162 = vrot.lane.b32.xlu0 %v161, 24
    %v163 = vpop.permute.xlu0 %162
    %vm164 = vcmask 261312
    %165 = vst.msk [vmem:[#allocation0] ss:$8 sm:$0xf] %vm164, %v163
    %s166 = scalar_lea.vmem %s0, 2
    %s167 = smov 3
    %v168 = vld [vmem:[%s166] ss:$16 sm:%s167]
    %s169 = scalar_lea.vmem %s0, 2
    %s170 = smov 12
    %v171 = vld [vmem:[%s169] ss:$16 sm:%s170]
    %vm172 = vcmask 1043458
    %v173 = vsel %vm172, %v171, %v168
    %174 = vrot.lane.b32.xlu0 %v173, 16
    %v175 = vpop.permute.xlu0 %174
    %vm176 = vcmask 195712
    %177 = vst.msk [vmem:[#allocation0] ss:$8 sm:$0xf] %vm176, %v175
    %s178 = scalar_lea.vmem %s0, 1
    %s179 = smov 3
    %v180 = vld [vmem:[%s178] ss:$16 sm:%s179]
    %s181 = scalar_lea.vmem %s0, 1
    %s182 = smov 12
    %v183 = vld [vmem:[%s181] ss:$16 sm:%s182]
    %vm184 = vcmask 1043458
    %v185 = vsel %vm184, %v183, %v180
    %186 = vrot.lane.b32.xlu0 %v185, 8
    %v187 = vpop.permute.xlu0 %186
    %vm188 = vcmask 130112
    %189 = vst.msk [vmem:[#allocation0] ss:$8 sm:$0xf] %vm188, %v187
    %s191 = sshllo.u32 0, 1
    %v193 = vld [vmem:[#allocation0] sm:%s191]
    %s194 = sshllo.u32 0, 1
    %195 = vst [vmem:[%s1] sm:%s194] %v193
    %s196 = scalar_lea.vmem [#allocation0], 8
    %v197 = vld [vmem:[%s196] sm:%s191]
    %s198 = sshllo.u32 0, 1
    %s199 = scalar_lea.vmem %s1, 1
    %200 = vst [vmem:[%s199] sm:%s198] %v197
    %s201 = scalar_lea.vmem [#allocation0], 16
    %v202 = vld [vmem:[%s201] sm:%s191]
    %s203 = sshllo.u32 0, 1
    %s204 = smul.addr 1, 2
    %s205 = scalar_lea.vmem %s1, %s204
    %206 = vst [vmem:[%s205] sm:%s203] %v202
    %s207 = scalar_lea.vmem [#allocation0], 24
    %v208 = vld [vmem:[%s207] sm:%s191]
    %s209 = sshllo.u32 0, 1
    %s210 = smul.addr 1, 3
    %s211 = scalar_lea.vmem %s1, %s210
    %212 = vst [vmem:[%s211] sm:%s209] %v208

// kernel: my_model_forward.1
$region0: #{my_model_forward.1}
  #allocation0 [shape = 'u32[]', space=smem, size = 0x4, offset = 0x4, fixed_abs, tag = 'smem constant byte address 0x4 - core index']
  #allocation1 [shape = 'u32[144,128]{1,0:T(1,128)}', space=vmem, size = 0x12000, scoped, tag = 'internal scratch']
  %s0 = inlined_call_operand.vmem [shape: f32[16,128], index: 0, kind: input, shape index: {}]
  %s1 = inlined_call_operand.vmem [shape: f32[128,512], index: 1, kind: input, shape index: {}]
  %s2 = inlined_call_operand.vmem [shape: f32[1,512], index: 2, kind: input, shape index: {}]
  %s3 = inlined_call_operand.vmem [shape: f32[16,512], index: 3, kind: output, shape index: {}]
  %s4 = sld [smem:[#allocation0]]
  $region22: #{my_model_forward.1} parent=0
    _
  %s6 = ssub.s32 1, %s4
  %s7 = scalar_select 0, %s6, %s4
  // Predicated region
  $region2: #{my_model_forward.1} parent=0 // pred_check
    _
  $region3: #{my_model_forward.1} parent=0 // pred_check_branch
    %9 = sbr.rel (0) target = $region5
  $region4: #{my_model_forward.1} parent=0 // pred_region
    _
  $region5: #{my_model_forward.1} parent=0 // pred_fallthru
    _
  // Predicated region
  $region6: #{my_model_forward.1} parent=0 // pred_check
    _
  $region7: #{my_model_forward.1} parent=0 // pred_check_branch
    %11 = sbr.rel (0) target = $region9
  $region8: #{my_model_forward.1} parent=0 // pred_region
    _
  $region9: #{my_model_forward.1} parent=0 // pred_fallthru
    _
  // Predicated region
  $region10: #{my_model_forward.1} parent=0 // pred_check
    _
  $region11: #{my_model_forward.1} parent=0 // pred_check_branch
    %13 = sbr.rel (0) target = $region13
  $region12: #{my_model_forward.1} parent=0 // pred_region
    _
  $region13: #{my_model_forward.1} parent=0 // pred_fallthru
    _
  %v14 = vld [vmem:[%s0] sm:$0xff]
  %v15 = vld [vmem:[%s0 + $0x8] sm:$0xff]
  %v16 = vld [vmem:[%s1] sm:$0xff]
  %v17 = vld [vmem:[%s1 + $0x8] sm:$0xff]
  %v18 = vld [vmem:[%s1 + $0x10] sm:$0xff]
  %v19 = vld [vmem:[%s1 + $0x18] sm:$0xff]
  %v20 = vld [vmem:[%s1 + $0x20] sm:$0xff]
  %v21 = vld [vmem:[%s1 + $0x28] sm:$0xff]
  %v22 = vld [vmem:[%s1 + $0x30] sm:$0xff]
  %v23 = vld [vmem:[%s1 + $0x38] sm:$0xff]
  %v24 = vld [vmem:[%s1 + $0x40] sm:$0xff]
  %v25 = vld [vmem:[%s1 + $0x48] sm:$0xff]
  %v26 = vld [vmem:[%s1 + $0x50] sm:$0xff]
  %v27 = vld [vmem:[%s1 + $0x58] sm:$0xff]
  %v28 = vld [vmem:[%s1 + $0x60] sm:$0xff]
  %v29 = vld [vmem:[%s1 + $0x68] sm:$0xff]
  %v30 = vld [vmem:[%s1 + $0x70] sm:$0xff]
  %v31 = vld [vmem:[%s1 + $0x78] sm:$0xff]
  %v32 = vld [vmem:[%s1 + $0x80] sm:$0xff]
  %v33 = vld [vmem:[%s1 + $0x88] sm:$0xff]
  %v34 = vld [vmem:[%s1 + $0x90] sm:$0xff]
  %v35 = vld [vmem:[%s1 + $0x98] sm:$0xff]
  %v36 = vld [vmem:[%s1 + $0xa0] sm:$0xff]
  %v37 = vld [vmem:[%s1 + $0xa8] sm:$0xff]
  %v38 = vld [vmem:[%s1 + $0xb0] sm:$0xff]
  %v39 = vld [vmem:[%s1 + $0xb8] sm:$0xff]
  %v40 = vld [vmem:[%s1 + $0xc0] sm:$0xff]
  %v41 = vld [vmem:[%s1 + $0xc8] sm:$0xff]
  %v42 = vld [vmem:[%s1 + $0xd0] sm:$0xff]
  %v43 = vld [vmem:[%s1 + $0xd8] sm:$0xff]
  %v44 = vld [vmem:[%s1 + $0xe0] sm:$0xff]
  %v45 = vld [vmem:[%s1 + $0xe8] sm:$0xff]
  %v46 = vld [vmem:[%s1 + $0xf0] sm:$0xff]
  %v47 = vld [vmem:[%s1 + $0xf8] sm:$0xff]
  %v48 = vld [vmem:[%s1 + $0x100] sm:$0xff]
  %v49 = vld [vmem:[%s1 + $0x108] sm:$0xff]
  %v50 = vld [vmem:[%s1 + $0x110] sm:$0xff]
  %v51 = vld [vmem:[%s1 + $0x118] sm:$0xff]
  %v52 = vld [vmem:[%s1 + $0x120] sm:$0xff]
  %v53 = vld [vmem:[%s1 + $0x128] sm:$0xff]
  %v54 = vld [vmem:[%s1 + $0x130] sm:$0xff]
  %v55 = vld [vmem:[%s1 + $0x138] sm:$0xff]
  %v56 = vld [vmem:[%s1 + $0x140] sm:$0xff]
  %v57 = vld [vmem:[%s1 + $0x148] sm:$0xff]
  %v58 = vld [vmem:[%s1 + $0x150] sm:$0xff]
  %v59 = vld [vmem:[%s1 + $0x158] sm:$0xff]
  %v60 = vld [vmem:[%s1 + $0x160] sm:$0xff]
  %v61 = vld [vmem:[%s1 + $0x168] sm:$0xff]
  %v62 = vld [vmem:[%s1 + $0x170] sm:$0xff]
  %v63 = vld [vmem:[%s1 + $0x178] sm:$0xff]
  %v64 = vld [vmem:[%s1 + $0x180] sm:$0xff]
  %v65 = vld [vmem:[%s1 + $0x188] sm:$0xff]
  %v66 = vld [vmem:[%s1 + $0x190] sm:$0xff]
  %v67 = vld [vmem:[%s1 + $0x198] sm:$0xff]
  %v68 = vld [vmem:[%s1 + $0x1a0] sm:$0xff]
  %v69 = vld [vmem:[%s1 + $0x1a8] sm:$0xff]
  %v70 = vld [vmem:[%s1 + $0x1b0] sm:$0xff]
  %v71 = vld [vmem:[%s1 + $0x1b8] sm:$0xff]
  %v72 = vld [vmem:[%s1 + $0x1c0] sm:$0xff]
  %v73 = vld [vmem:[%s1 + $0x1c8] sm:$0xff]
  %v74 = vld [vmem:[%s1 + $0x1d0] sm:$0xff]
  %v75 = vld [vmem:[%s1 + $0x1d8] sm:$0xff]
  %v76 = vld [vmem:[%s1 + $0x1e0] sm:$0xff]
  %v77 = vld [vmem:[%s1 + $0x1e8] sm:$0xff]
  %v78 = vld [vmem:[%s1 + $0x1f0] sm:$0xff]
  %v79 = vld [vmem:[%s1 + $0x1f8] sm:$0xff]
  %v80 = vld [vmem:[%s2] sm:$0xf]
  %v82 = vlaneseq
  %v83 = vshrl.u32 %v82, 7
  %v84 = vsub.s32 0, %v83
  %v85 = vrot.slane %v80, %v84
  %v86 = vlaneseq
  %v87 = vshrl.u32 %v86, 7
  %v88 = vsub.s32 1, %v87
  %v89 = vrot.slane %v80, %v88
  %v90 = vlaneseq
  %v91 = vshrl.u32 %v90, 7
  %v92 = vsub.s32 2, %v91
  %v93 = vrot.slane %v80, %v92
  %v94 = vlaneseq
  %v95 = vshrl.u32 %v94, 7
  %v96 = vsub.s32 3, %v95
  %v97 = vrot.slane %v80, %v96
  %102 = vmatprep.subr.mxu0 %v17
  %103 = vmatpush1.msra.mxu0 %v16
  %104 = vmatprep.subr.mxu0 %v21
  %105 = vmatpush1.msra.mxu0 %v20
  %106 = vmatprep.subr.mxu0 %v25
  %107 = vmatpush1.msra.mxu0 %v24
  %108 = vmatprep.subr.mxu0 %v29
  %109 = vmatpush1.msra.mxu0 %v28
  %110 = vmatprep.subr.mxu0 %v33
  %111 = vmatpush1.msra.mxu0 %v32
  %112 = vmatprep.subr.mxu0 %v37
  %113 = vmatpush1.msra.mxu0 %v36
  %114 = vmatprep.subr.mxu0 %v41
  %115 = vmatpush1.msra.mxu0 %v40
  %116 = vmatprep.subr.mxu0 %v45
  %117 = vmatpush1.msra.mxu0 %v44
  %118 = vmatprep.subr.mxu0 %v49
  %119 = vmatpush1.msra.mxu0 %v48
  %120 = vmatprep.subr.mxu0 %v53
  %121 = vmatpush1.msra.mxu0 %v52
  %122 = vmatprep.subr.mxu0 %v57
  %123 = vmatpush1.msra.mxu0 %v56
  %124 = vmatprep.subr.mxu0 %v61
  %125 = vmatpush1.msra.mxu0 %v60
  %126 = vmatprep.subr.mxu0 %v65
  %127 = vmatpush1.msra.mxu0 %v64
  %128 = vmatprep.subr.mxu0 %v69
  %129 = vmatpush1.msra.mxu0 %v68
  %130 = vmatprep.subr.mxu0 %v73
  %131 = vmatpush1.msra.mxu0 %v72
  %132 = vmatprep.subr.mxu0 %v77
  %133 = vmatpush1.msra.mxu0 %v76
  %134 = vmatprep.subr.mxu0 0.0
  %135 = vmatpush1.msra.mxu0 0.0
  %136 = vmatprep.subr.mxu0 0.0
  %137 = vmatpush1.msra.mxu0 0.0
  %138 = vmatprep.subr.mxu0 0.0
  %139 = vmatpush1.msra.mxu0 0.0
  %140 = vmatprep.subr.mxu0 0.0
  %141 = vmatpush1.msra.mxu0 0.0
  %142 = vmatprep.subr.mxu0 0.0
  %143 = vmatpush1.msra.mxu0 0.0
  %144 = vmatprep.subr.mxu0 0.0
  %145 = vmatpush1.msra.mxu0 0.0
  %146 = vmatprep.subr.mxu0 0.0
  %147 = vmatpush1.msra.mxu0 0.0
  %148 = vmatprep.subr.mxu0 0.0
  %149 = vmatpush1.msra.mxu0 0.0
  %150 = vmatprep.subr.mxu0 0.0
  %151 = vmatpush1.msra.mxu0 0.0
  %152 = vmatprep.subr.mxu0 0.0
  %153 = vmatpush1.msra.mxu0 0.0
  %154 = vmatprep.subr.mxu0 0.0
  %155 = vmatpush1.msra.mxu0 0.0
  %156 = vmatprep.subr.mxu0 0.0
  %157 = vmatpush1.msra.mxu0 0.0
  %158 = vmatprep.subr.mxu0 0.0
  %159 = vmatpush1.msra.mxu0 0.0
  %160 = vmatprep.subr.mxu0 0.0
  %161 = vmatpush1.msra.mxu0 0.0
  %162 = vmatprep.subr.mxu0 0.0
  %163 = vmatpush1.msra.mxu0 0.0
  %164 = vmatprep.subr.mxu0 0.0
  %165 = vmatpush1.msra.mxu0 0.0
  %166 = vmatprep.mubr.f32.mxu0 0.0
  %167 = vmatmul.mubr.f32.gmra.mrb[0].mxu0 %v14
  %v168 = vpop.f32.mrb[0].mxu0
  %v169 = vadd.f32 %v85, %v168
  %v170 = vpop.f32.mrb[0].mxu0
  %v171 = vadd.f32 %v89, %v170
  %172 = vmatprep.mubr.f32.mxu0 0.0
  %173 = vmatmul.mubr.f32.gmra.mrb[0].mxu0 %v15
  %v174 = vpop.f32.mrb[0].mxu0
  %v175 = vadd.f32 %v85, %v174
  %v176 = vpop.f32.mrb[0].mxu0
  %v177 = vadd.f32 %v89, %v176
  %178 = vdwg.mxu0
  %179 = vmatprep.subr.mxu0 %v19
  %180 = vmatpush1.msra.mxu0 %v18
  %181 = vmatprep.subr.mxu0 %v23
  %182 = vmatpush1.msra.mxu0 %v22
  %183 = vmatprep.subr.mxu0 %v27
  %184 = vmatpush1.msra.mxu0 %v26
  %185 = vmatprep.subr.mxu0 %v31
  %186 = vmatpush1.msra.mxu0 %v30
  %187 = vmatprep.subr.mxu0 %v35
  %188 = vmatpush1.msra.mxu0 %v34
  %189 = vmatprep.subr.mxu0 %v39
  %190 = vmatpush1.msra.mxu0 %v38
  %191 = vmatprep.subr.mxu0 %v43
  %192 = vmatpush1.msra.mxu0 %v42
  %193 = vmatprep.subr.mxu0 %v47
  %194 = vmatpush1.msra.mxu0 %v46
  %195 = vmatprep.subr.mxu0 %v51
  %196 = vmatpush1.msra.mxu0 %v50
  %197 = vmatprep.subr.mxu0 %v55
  %198 = vmatpush1.msra.mxu0 %v54
  %199 = vmatprep.subr.mxu0 %v59
  %200 = vmatpush1.msra.mxu0 %v58
  %201 = vmatprep.subr.mxu0 %v63
  %202 = vmatpush1.msra.mxu0 %v62
  %203 = vmatprep.subr.mxu0 %v67
  %204 = vmatpush1.msra.mxu0 %v66
  %205 = vmatprep.subr.mxu0 %v71
  %206 = vmatpush1.msra.mxu0 %v70
  %207 = vmatprep.subr.mxu0 %v75
  %208 = vmatpush1.msra.mxu0 %v74
  %209 = vmatprep.subr.mxu0 %v79
  %210 = vmatpush1.msra.mxu0 %v78
  %211 = vmatprep.subr.mxu0 0.0
  %212 = vmatpush1.msra.mxu0 0.0
  %213 = vmatprep.subr.mxu0 0.0
  %214 = vmatpush1.msra.mxu0 0.0
  %215 = vmatprep.subr.mxu0 0.0
  %216 = vmatpush1.msra.mxu0 0.0
  %217 = vmatprep.subr.mxu0 0.0
  %218 = vmatpush1.msra.mxu0 0.0
  %219 = vmatprep.subr.mxu0 0.0
  %220 = vmatpush1.msra.mxu0 0.0
  %221 = vmatprep.subr.mxu0 0.0
  %222 = vmatpush1.msra.mxu0 0.0
  %223 = vmatprep.subr.mxu0 0.0
  %224 = vmatpush1.msra.mxu0 0.0
  %225 = vmatprep.subr.mxu0 0.0
  %226 = vmatpush1.msra.mxu0 0.0
  %227 = vmatprep.subr.mxu0 0.0
  %228 = vmatpush1.msra.mxu0 0.0
  %229 = vmatprep.subr.mxu0 0.0
  %230 = vmatpush1.msra.mxu0 0.0
  %231 = vmatprep.subr.mxu0 0.0
  %232 = vmatpush1.msra.mxu0 0.0
  %233 = vmatprep.subr.mxu0 0.0
  %234 = vmatpush1.msra.mxu0 0.0
  %235 = vmatprep.subr.mxu0 0.0
  %236 = vmatpush1.msra.mxu0 0.0
  %237 = vmatprep.subr.mxu0 0.0
  %238 = vmatpush1.msra.mxu0 0.0
  %239 = vmatprep.subr.mxu0 0.0
  %240 = vmatpush1.msra.mxu0 0.0
  %241 = vmatprep.subr.mxu0 0.0
  %242 = vmatpush1.msra.mxu0 0.0
  %243 = vmatprep.mubr.f32.mxu0 0.0
  %244 = vmatmul.mubr.f32.gmra.mrb[0].mxu0 %v14
  %v245 = vpop.f32.mrb[0].mxu0
  %v246 = vadd.f32 %v93, %v245
  %v247 = vpop.f32.mrb[0].mxu0
  %v248 = vadd.f32 %v97, %v247
  %249 = vmatprep.mubr.f32.mxu0 0.0
  %250 = vmatmul.mubr.f32.gmra.mrb[0].mxu0 %v15
  %v251 = vpop.f32.mrb[0].mxu0
  %v252 = vadd.f32 %v93, %v251
  %v253 = vpop.f32.mrb[0].mxu0
  %v254 = vadd.f32 %v97, %v253
  %255 = vdwg.mxu0
  %256 = vst [vmem:[%s3] sm:$0xff] %v169
  %257 = vst [vmem:[%s3 + $0x8] sm:$0xff] %v171
  %258 = vst [vmem:[%s3 + $0x10] sm:$0xff] %v246
  %259 = vst [vmem:[%s3 + $0x18] sm:$0xff] %v248
  %260 = vst [vmem:[%s3 + $0x20] sm:$0xff] %v175
  %261 = vst [vmem:[%s3 + $0x28] sm:$0xff] %v177
  %262 = vst [vmem:[%s3 + $0x30] sm:$0xff] %v252
  %263 = vst [vmem:[%s3 + $0x38] sm:$0xff] %v254
  // Predicated region
  $region14: #{my_model_forward.1} parent=0 // pred_check
    _
  $region15: #{my_model_forward.1} parent=0 // pred_check_branch
    %265 = sbr.rel (0) target = $region17
  $region16: #{my_model_forward.1} parent=0 // pred_region
    _
  $region17: #{my_model_forward.1} parent=0 // pred_fallthru
    _
  // Predicated region
  $region18: #{my_model_forward.1} parent=0 // pred_check
    _
  $region19: #{my_model_forward.1} parent=0 // pred_check_branch
    %267 = sbr.rel (0) target = $region21
  $region20: #{my_model_forward.1} parent=0 // pred_region
    _
  $region21: #{my_model_forward.1} parent=0 // pred_fallthru
    _

</llo_original>
